<compile_context>
chip_gen: v6e
topology: v6e:2x2x1
jax: 0.10.0
libtpu: 0.0.40
codegen_flags: <defaults>
</compile_context>

<pallas_src>
import jax
import jax.numpy as jnp
from jax.experimental import pallas as pl
from jax.experimental.pallas import tpu as pltpu

# ------------------------- scaled-down dimensions -------------------------
C_IN = 3            # RGB input
PATCH = 4           # stride-4 stem -> im2col K = 4*4*3 = 48
C1, C2, C3, C4 = 32, 64, 128, 256   # real ResNet50: 256, 512, 1024, 2048 (scaled down)
N_CLS = 20          # coco=False -> 20 classes (x.view(-1, 20) hardcodes 20)
N_PAD = 128         # lane-dense classifier output width (zero-padded, sliced outside)

_VMEM_LIMIT = 32 * 1024 * 1024   # explicit budget: fits v7x's 64 MiB VMEM with headroom


def _pick_tile(dim, max_tile, align):
    """Largest tile <= max_tile that divides dim and is `align`-aligned; else full dim."""
    if dim <= max_tile:
        return dim
    t = (max_tile // align) * align
    while t >= align:
        if dim % t == 0:
            return t
        t -= align
    return dim


# ------------------------- tiled matmul + bias + ReLU -------------------------
def _matmul_bias_relu_kernel(x_ref, w_ref, b_ref, o_ref, acc_ref):
    @pl.when(pl.program_id(2) == 0)
    def _init():
        acc_ref[...] = jnp.zeros_like(acc_ref)

    acc_ref[...] += jnp.dot(x_ref[...], w_ref[...],
                            preferred_element_type=jnp.float32)

    @pl.when(pl.program_id(2) == pl.num_programs(2) - 1)
    def _finalize():
        y = jnp.maximum(acc_ref[...] + b_ref[...].astype(jnp.float32), 0.0)
        o_ref[...] = y.astype(o_ref.dtype)


def matmul_bias_relu(x, w, b, out_dtype=jnp.bfloat16,
                     tm_max=512, tn_max=512, tk_max=512):
    # x: (M, K) bf16, w: (K, N) bf16, b: (1, N) f32 -> (M, N) out_dtype
    M, K = x.shape
    _, N = w.shape
    tm = _pick_tile(M, tm_max, 8)
    tn = _pick_tile(N, tn_max, 128)
    tk = _pick_tile(K, tk_max, 128)
    grid = (M // tm, N // tn, K // tk)
    return pl.pallas_call(
        _matmul_bias_relu_kernel,
        grid=grid,
        out_shape=jax.ShapeDtypeStruct((M, N), out_dtype),
        in_specs=[
            pl.BlockSpec((tm, tk), lambda i, j, k: (i, k)),
            pl.BlockSpec((tk, tn), lambda i, j, k: (k, j)),
            pl.BlockSpec((1, tn), lambda i, j, k: (0, j)),
        ],
        out_specs=pl.BlockSpec((tm, tn), lambda i, j, k: (i, j)),
        scratch_shapes=[pltpu.VMEM((tm, tn), jnp.float32)],
        compiler_params=pltpu.CompilerParams(
            dimension_semantics=("parallel", "parallel", "arbitrary"),
            vmem_limit_bytes=_VMEM_LIMIT),
    )(x, w, b)


# ------------------------- fused stage3 + stage4 + classifier -------------------------
def _fused_tail_kernel(x_ref, w3_ref, b3_ref, w4_ref, b4_ref, wc_ref, cam_ref):
    # Activation stays in VMEM for the whole chain (per M-tile of positions).
    h3 = jnp.dot(x_ref[...], w3_ref[...], preferred_element_type=jnp.float32)
    h3 = jnp.maximum(h3 + b3_ref[...].astype(jnp.float32), 0.0)
    h4 = jnp.dot(h3.astype(w4_ref.dtype), w4_ref[...],
                 preferred_element_type=jnp.float32)
    h4 = jnp.maximum(h4 + b4_ref[...].astype(jnp.float32), 0.0)
    cam = jnp.dot(h4.astype(wc_ref.dtype), wc_ref[...],
                  preferred_element_type=jnp.float32)
    cam_ref[...] = cam.astype(cam_ref.dtype)


def fused_tail(x, w3, b3, w4, b4, wc, tm_max=256):
    # x: (M, C2) bf16 -> (M, N_PAD) f32.  All weights (bf16) fit in VMEM even at
    # full ResNet50 sizes (~6 MiB) with tm=256, well under the 32 MiB budget.
    M, c2 = x.shape
    _, c3 = w3.shape
    _, c4 = w4.shape
    _, npad = wc.shape
    tm = _pick_tile(M, tm_max, 8)
    return pl.pallas_call(
        _fused_tail_kernel,
        grid=(M // tm,),
        out_shape=jax.ShapeDtypeStruct((M, npad), jnp.float32),
        in_specs=[
            pl.BlockSpec((tm, c2), lambda i: (i, 0)),
            pl.BlockSpec((c2, c3), lambda i: (0, 0)),
            pl.BlockSpec((1, c3), lambda i: (0, 0)),
            pl.BlockSpec((c3, c4), lambda i: (0, 0)),
            pl.BlockSpec((1, c4), lambda i: (0, 0)),
            pl.BlockSpec((c4, npad), lambda i: (0, 0)),
        ],
        out_specs=pl.BlockSpec((tm, npad), lambda i: (i, 0)),
        compiler_params=pltpu.CompilerParams(
            dimension_semantics=("parallel",),
            vmem_limit_bytes=_VMEM_LIMIT),
    )(x, w3, b3, w4, b4, wc)


# ------------------------- global average pool (GAP) -------------------------
def _gap_kernel(cam_ref, o_ref):
    # cam: (B, HW, N_PAD) f32 -> (B, N_PAD) f32; GAP commutes with the 1x1 classifier.
    o_ref[...] = jnp.mean(cam_ref[...], axis=1).astype(o_ref.dtype)


def gap_pool(cam):
    B, HW, npad = cam.shape
    return pl.pallas_call(
        _gap_kernel,
        out_shape=jax.ShapeDtypeStruct((B, npad), jnp.float32),
    )(cam)


# ------------------------- parameters -------------------------
def init_params(key):
    ks = jax.random.split(key, 5)

    def dense(k, cin, cout):
        kw, kb = jax.random.split(k)
        w = jax.random.normal(kw, (cin, cout), jnp.float32) * (1.0 / jnp.sqrt(cin))
        b = jax.random.normal(kb, (1, cout), jnp.float32) * 0.01
        return w.astype(jnp.bfloat16), b   # weights bf16, biases f32

    w1, b1 = dense(ks[0], PATCH * PATCH * C_IN, C1)   # im2col stem, K=48
    w2, b2 = dense(ks[1], C1, C2)
    w3, b3 = dense(ks[2], C2, C3)
    w4, b4 = dense(ks[3], C3, C4)
    # nn.Conv2d(C4, n_cls, 1, bias=False): (n_cls, C4, 1, 1) -> (C4, n_cls) matmul form,
    # zero-padded to N_PAD lanes so the kernel output is lane-dense.
    w_cls = jax.random.normal(ks[4], (C4, N_CLS), jnp.float32) * (1.0 / jnp.sqrt(C4))
    w_cls_pad = jnp.zeros((C4, N_PAD), jnp.bfloat16).at[:, :N_CLS].set(
        w_cls.astype(jnp.bfloat16))
    return dict(w1=w1, b1=b1, w2=w2, b2=b2, w3=w3, b3=b3, w4=w4, b4=b4,
                w_cls_pad=w_cls_pad)


# ------------------------- model glue -------------------------
def _backbone_cam(x_nchw, params):
    """Runs stage1..4 + per-pixel classifier; returns padded CAM (B, H/16, W/16, N_PAD)."""
    x = jnp.transpose(x_nchw, (0, 2, 3, 1)).astype(jnp.bfloat16)   # NCHW -> NHWC, bf16
    B, H, W, _ = x.shape

    # stage1 stand-in: im2col of non-overlapping 4x4 / stride-4 patches (K=48).
    H1, W1 = H // PATCH, W // PATCH
    xp = x.reshape(B, H1, PATCH, W1, PATCH, C_IN).transpose(0, 1, 3, 2, 4, 5)
    xp = xp.reshape(B * H1 * W1, PATCH * PATCH * C_IN)
    h1 = matmul_bias_relu(xp, params["w1"], params["b1"]).reshape(B, H1, W1, C1)

    # stage2 (stride 2), then .detach()
    # TODO(synk): fold the stride-2 subsampling into the kernel DMA (pl.ds stride)
    # instead of an XLA slice.
    h1s = h1[:, ::2, ::2, :]
    _, H2, W2, _ = h1s.shape
    h2 = matmul_bias_relu(h1s.reshape(B * H2 * W2, C1), params["w2"], params["b2"])
    h2 = jax.lax.stop_gradient(h2).reshape(B, H2, W2, C2)

    # fused stage3 (stride 2) + stage4 (stride 1) + 1x1 classifier (N padded to 128)
    h2s = h2[:, ::2, ::2, :]
    _, H3, W3, _ = h2s.shape
    cam_p = fused_tail(h2s.reshape(B * H3 * W3, C2),
                       params["w3"], params["b3"],
                       params["w4"], params["b4"],
                       params["w_cls_pad"])
    return cam_p.reshape(B, H3, W3, N_PAD)


def cam_forward(x_nchw, params, is_cls=False, cats=None):
    cam_p = _backbone_cam(x_nchw, params)
    B, H3, W3, _ = cam_p.shape
    indss = None
    if is_cls:
        # GAP then classifier == classifier then GAP (1x1 conv is linear).
        pooled = gap_pool(cam_p.reshape(B, H3 * W3, N_PAD))
        out = pooled[:, :N_CLS].reshape(-1, 20)
    else:
        out = jnp.transpose(cam_p[..., :N_CLS], (0, 3, 1, 2))   # back to NCHW
    if cats is None:
        return out
    return out, indss


def cam_and_logits(x_nchw, params):
    """Both heads from a single backbone pass (classifier and GAP commute)."""
    cam_p = _backbone_cam(x_nchw, params)
    B, H3, W3, _ = cam_p.shape
    cam = jnp.transpose(cam_p[..., :N_CLS], (0, 3, 1, 2))
    logits = gap_pool(cam_p.reshape(B, H3 * W3, N_PAD))[:, :N_CLS].reshape(-1, 20)
    return cam, logits


# ------------------------- main -------------------------
if __name__ == "__main__":
    key = jax.random.PRNGKey(0)
    pkey, xkey = jax.random.split(key)
    params = init_params(pkey)

    # NCHW input, like the PyTorch module (small: B=2, C=3, H=W=32)
    x = jax.random.normal(xkey, (2, 3, 32, 32), dtype=jnp.float32)

    cam_maps, logits = jax.block_until_ready(
        jax.jit(cam_and_logits)(x, params))

    assert cam_maps.shape == (2, N_CLS, 2, 2), cam_maps.shape   # (B, n_cls, H/16, W/16)
    assert logits.shape == (2, N_CLS), logits.shape             # view(-1, 20)
    assert jnp.all(jnp.isfinite(cam_maps)) and jnp.all(jnp.isfinite(logits))

    print("KERNEL_OK")
</pallas_src>

<mosaic_0001>
module attributes {stable_mosaic.version = 11 : i64} {
  func.func @_matmul_bias_relu_kernel(%arg0: i32, %arg1: i32, %arg2: i32, %arg3: memref<128x48xbf16, #tpu.memory_space<vmem>>, %arg4: memref<48x32xbf16, #tpu.memory_space<vmem>>, %arg5: memref<1x32xf32, #tpu.memory_space<vmem>>, %arg6: memref<128x32xbf16, #tpu.memory_space<vmem>>, %arg7: memref<128x32xf32, #tpu.memory_space<vmem>>) attributes {dimension_semantics = [#tpu.dimension_semantics<parallel>, #tpu.dimension_semantics<parallel>, #tpu.dimension_semantics<arbitrary>], iteration_bounds = array<i64: 1, 1, 1>, scalar_prefetch = 0 : i64, scratch_operands = 1 : i64, tpu.core_type = #tpu.core_type<tc>, window_params = [{transform_indices = @transform_0, window_bounds = array<i64: 128, 48>}, {transform_indices = @transform_1, window_bounds = array<i64: 48, 32>}, {transform_indices = @transform_2, window_bounds = array<i64: 1, 32>}, {transform_indices = @transform_3, window_bounds = array<i64: 128, 32>}]} {
    %c0_i32 = arith.constant 0 : i32
    %0 = arith.cmpi eq, %arg2, %c0_i32 : i32
    %1 = arith.extui %0 : i1 to i32
    %c0_i32_0 = arith.constant 0 : i32
    %2 = arith.cmpi ne, %1, %c0_i32_0 : i32
    scf.if %2 {
      %cst_10 = arith.constant 0.000000e+00 : f32
      %12 = vector.broadcast %cst_10 : f32 to vector<128x32xf32>
      %c0_11 = arith.constant 0 : index
      %c0_12 = arith.constant 0 : index
      %13 = vector.load %arg7[%c0_11, %c0_12] : memref<128x32xf32, #tpu.memory_space<vmem>>, vector<128x32xf32>
      tpu.vector_store %arg7[%c0_11, %c0_12], %12 {strides = array<i32>} : memref<128x32xf32, #tpu.memory_space<vmem>>, vector<128x32xf32>,
    } else {
    }
    %c0 = arith.constant 0 : index
    %c0_1 = arith.constant 0 : index
    %3 = vector.load %arg7[%c0, %c0_1] : memref<128x32xf32, #tpu.memory_space<vmem>>, vector<128x32xf32>
    %c0_2 = arith.constant 0 : index
    %c0_3 = arith.constant 0 : index
    %4 = vector.load %arg3[%c0_2, %c0_3] : memref<128x48xbf16, #tpu.memory_space<vmem>>, vector<128x48xbf16>
    %c0_4 = arith.constant 0 : index
    %c0_5 = arith.constant 0 : index
    %5 = vector.load %arg4[%c0_4, %c0_5] : memref<48x32xbf16, #tpu.memory_space<vmem>>, vector<48x32xbf16>
    %cst = arith.constant dense<0.000000e+00> : vector<128x32xf32>
    %6 = tpu.matmul %4, %5, %cst {dimension_numbers = #tpu.dot_dimension_numbers<[1], [0], [0], [1], [0, 0, 1, 1], [], []>} : vector<128x48xbf16>, vector<48x32xbf16>, vector<128x32xf32> -> vector<128x32xf32>
    %7 = arith.addf %3, %6 : vector<128x32xf32>
    %c0_6 = arith.constant 0 : index
    %c0_7 = arith.constant 0 : index
    %8 = vector.load %arg7[%c0_6, %c0_7] : memref<128x32xf32, #tpu.memory_space<vmem>>, vector<128x32xf32>
    tpu.vector_store %arg7[%c0_6, %c0_7], %7 {strides = array<i32>} : memref<128x32xf32, #tpu.memory_space<vmem>>, vector<128x32xf32>,
    %c0_i32_8 = arith.constant 0 : i32
    %9 = arith.cmpi eq, %arg2, %c0_i32_8 : i32
    %10 = arith.extui %9 : i1 to i32
    %c0_i32_9 = arith.constant 0 : i32
    %11 = arith.cmpi ne, %10, %c0_i32_9 : i32
    scf.if %11 {
      %c0_10 = arith.constant 0 : index
      %c0_11 = arith.constant 0 : index
      %12 = vector.load %arg7[%c0_10, %c0_11] : memref<128x32xf32, #tpu.memory_space<vmem>>, vector<128x32xf32>
      %c0_12 = arith.constant 0 : index
      %c0_13 = arith.constant 0 : index
      %13 = vector.load %arg5[%c0_12, %c0_13] : memref<1x32xf32, #tpu.memory_space<vmem>>, vector<1x32xf32>
      %14 = vector.broadcast %13 : vector<1x32xf32> to vector<128x32xf32>
      %15 = arith.addf %12, %14 : vector<128x32xf32>
      %cst_14 = arith.constant 0.000000e+00 : f32
      %16 = vector.broadcast %cst_14 : f32 to vector<128x32xf32>
      %17 = arith.maximumf %15, %16 : vector<128x32xf32>
      %18 = arith.truncf %17 : vector<128x32xf32> to vector<128x32xbf16>
      %c0_15 = arith.constant 0 : index
      %c0_16 = arith.constant 0 : index
      %19 = vector.load %arg6[%c0_15, %c0_16] : memref<128x32xbf16, #tpu.memory_space<vmem>>, vector<128x32xbf16>
      tpu.vector_store %arg6[%c0_15, %c0_16], %18 {strides = array<i32>} : memref<128x32xbf16, #tpu.memory_space<vmem>>, vector<128x32xbf16>,
    } else {
    }
    return
  }
  func.func @transform_0(%arg0: i32, %arg1: i32, %arg2: i32) -> (i32, i32) {
    %c0_i32 = arith.constant 0 : i32
    return %arg0, %arg2 : i32, i32
  }
  func.func @transform_1(%arg0: i32, %arg1: i32, %arg2: i32) -> (i32, i32) {
    %c0_i32 = arith.constant 0 : i32
    return %arg2, %arg1 : i32, i32
  }
  func.func @transform_2(%arg0: i32, %arg1: i32, %arg2: i32) -> (i32, i32) {
    %c0_i32 = arith.constant 0 : i32
    %c0_i32_0 = arith.constant 0 : i32
    return %c0_i32, %arg1 : i32, i32
  }
  func.func @transform_3(%arg0: i32, %arg1: i32, %arg2: i32) -> (i32, i32) {
    %c0_i32 = arith.constant 0 : i32
    return %arg0, %arg1 : i32, i32
  }
}

module attributes {stable_mosaic.version = 11 : i64} {
  func.func @_matmul_bias_relu_kernel(%arg0: i32, %arg1: i32, %arg2: i32, %arg3: memref<32x32xbf16, #tpu.memory_space<vmem>>, %arg4: memref<32x64xbf16, #tpu.memory_space<vmem>>, %arg5: memref<1x64xf32, #tpu.memory_space<vmem>>, %arg6: memref<32x64xbf16, #tpu.memory_space<vmem>>, %arg7: memref<32x64xf32, #tpu.memory_space<vmem>>) attributes {dimension_semantics = [#tpu.dimension_semantics<parallel>, #tpu.dimension_semantics<parallel>, #tpu.dimension_semantics<arbitrary>], iteration_bounds = array<i64: 1, 1, 1>, scalar_prefetch = 0 : i64, scratch_operands = 1 : i64, tpu.core_type = #tpu.core_type<tc>, window_params = [{transform_indices = @transform_0, window_bounds = array<i64: 32, 32>}, {transform_indices = @transform_1, window_bounds = array<i64: 32, 64>}, {transform_indices = @transform_2, window_bounds = array<i64: 1, 64>}, {transform_indices = @transform_3, window_bounds = array<i64: 32, 64>}]} {
    %c0_i32 = arith.constant 0 : i32
    %0 = arith.cmpi eq, %arg2, %c0_i32 : i32
    %1 = arith.extui %0 : i1 to i32
    %c0_i32_0 = arith.constant 0 : i32
    %2 = arith.cmpi ne, %1, %c0_i32_0 : i32
    scf.if %2 {
      %cst_10 = arith.constant 0.000000e+00 : f32
      %12 = vector.broadcast %cst_10 : f32 to vector<32x64xf32>
      %c0_11 = arith.constant 0 : index
      %c0_12 = arith.constant 0 : index
      %13 = vector.load %arg7[%c0_11, %c0_12] : memref<32x64xf32, #tpu.memory_space<vmem>>, vector<32x64xf32>
      tpu.vector_store %arg7[%c0_11, %c0_12], %12 {strides = array<i32>} : memref<32x64xf32, #tpu.memory_space<vmem>>, vector<32x64xf32>,
    } else {
    }
    %c0 = arith.constant 0 : index
    %c0_1 = arith.constant 0 : index
    %3 = vector.load %arg7[%c0, %c0_1] : memref<32x64xf32, #tpu.memory_space<vmem>>, vector<32x64xf32>
    %c0_2 = arith.constant 0 : index
    %c0_3 = arith.constant 0 : index
    %4 = vector.load %arg3[%c0_2, %c0_3] : memref<32x32xbf16, #tpu.memory_space<vmem>>, vector<32x32xbf16>
    %c0_4 = arith.constant 0 : index
    %c0_5 = arith.constant 0 : index
    %5 = vector.load %arg4[%c0_4, %c0_5] : memref<32x64xbf16, #tpu.memory_space<vmem>>, vector<32x64xbf16>
    %cst = arith.constant dense<0.000000e+00> : vector<32x64xf32>
    %6 = tpu.matmul %4, %5, %cst {dimension_numbers = #tpu.dot_dimension_numbers<[1], [0], [0], [1], [0, 0, 1, 1], [], []>} : vector<32x32xbf16>, vector<32x64xbf16>, vector<32x64xf32> -> vector<32x64xf32>
    %7 = arith.addf %3, %6 : vector<32x64xf32>
    %c0_6 = arith.constant 0 : index
    %c0_7 = arith.constant 0 : index
    %8 = vector.load %arg7[%c0_6, %c0_7] : memref<32x64xf32, #tpu.memory_space<vmem>>, vector<32x64xf32>
    tpu.vector_store %arg7[%c0_6, %c0_7], %7 {strides = array<i32>} : memref<32x64xf32, #tpu.memory_space<vmem>>, vector<32x64xf32>,
    %c0_i32_8 = arith.constant 0 : i32
    %9 = arith.cmpi eq, %arg2, %c0_i32_8 : i32
    %10 = arith.extui %9 : i1 to i32
    %c0_i32_9 = arith.constant 0 : i32
    %11 = arith.cmpi ne, %10, %c0_i32_9 : i32
    scf.if %11 {
      %c0_10 = arith.constant 0 : index
      %c0_11 = arith.constant 0 : index
      %12 = vector.load %arg7[%c0_10, %c0_11] : memref<32x64xf32, #tpu.memory_space<vmem>>, vector<32x64xf32>
      %c0_12 = arith.constant 0 : index
      %c0_13 = arith.constant 0 : index
      %13 = vector.load %arg5[%c0_12, %c0_13] : memref<1x64xf32, #tpu.memory_space<vmem>>, vector<1x64xf32>
      %14 = vector.broadcast %13 : vector<1x64xf32> to vector<32x64xf32>
      %15 = arith.addf %12, %14 : vector<32x64xf32>
      %cst_14 = arith.constant 0.000000e+00 : f32
      %16 = vector.broadcast %cst_14 : f32 to vector<32x64xf32>
      %17 = arith.maximumf %15, %16 : vector<32x64xf32>
      %18 = arith.truncf %17 : vector<32x64xf32> to vector<32x64xbf16>
      %c0_15 = arith.constant 0 : index
      %c0_16 = arith.constant 0 : index
      %19 = vector.load %arg6[%c0_15, %c0_16] : memref<32x64xbf16, #tpu.memory_space<vmem>>, vector<32x64xbf16>
      tpu.vector_store %arg6[%c0_15, %c0_16], %18 {strides = array<i32>} : memref<32x64xbf16, #tpu.memory_space<vmem>>, vector<32x64xbf16>,
    } else {
    }
    return
  }
  func.func @transform_0(%arg0: i32, %arg1: i32, %arg2: i32) -> (i32, i32) {
    %c0_i32 = arith.constant 0 : i32
    return %arg0, %arg2 : i32, i32
  }
  func.func @transform_1(%arg0: i32, %arg1: i32, %arg2: i32) -> (i32, i32) {
    %c0_i32 = arith.constant 0 : i32
    return %arg2, %arg1 : i32, i32
  }
  func.func @transform_2(%arg0: i32, %arg1: i32, %arg2: i32) -> (i32, i32) {
    %c0_i32 = arith.constant 0 : i32
    %c0_i32_0 = arith.constant 0 : i32
    return %c0_i32, %arg1 : i32, i32
  }
  func.func @transform_3(%arg0: i32, %arg1: i32, %arg2: i32) -> (i32, i32) {
    %c0_i32 = arith.constant 0 : i32
    return %arg0, %arg1 : i32, i32
  }
}

module attributes {stable_mosaic.version = 11 : i64} {
  func.func @_fused_tail_kernel(%arg0: i32, %arg1: memref<8x64xbf16, #tpu.memory_space<vmem>>, %arg2: memref<64x128xbf16, #tpu.memory_space<vmem>>, %arg3: memref<1x128xf32, #tpu.memory_space<vmem>>, %arg4: memref<128x256xbf16, #tpu.memory_space<vmem>>, %arg5: memref<1x256xf32, #tpu.memory_space<vmem>>, %arg6: memref<256x128xbf16, #tpu.memory_space<vmem>>, %arg7: memref<8x128xf32, #tpu.memory_space<vmem>>) attributes {dimension_semantics = [#tpu.dimension_semantics<parallel>], iteration_bounds = array<i64: 1>, scalar_prefetch = 0 : i64, scratch_operands = 0 : i64, tpu.core_type = #tpu.core_type<tc>, window_params = [{transform_indices = @transform_0, window_bounds = array<i64: 8, 64>}, {pipeline_mode = #tpu.pipeline_mode<synchronous>, transform_indices = @transform_1, window_bounds = array<i64: 64, 128>}, {pipeline_mode = #tpu.pipeline_mode<synchronous>, transform_indices = @transform_2, window_bounds = array<i64: 1, 128>}, {pipeline_mode = #tpu.pipeline_mode<synchronous>, transform_indices = @transform_3, window_bounds = array<i64: 128, 256>}, {pipeline_mode = #tpu.pipeline_mode<synchronous>, transform_indices = @transform_4, window_bounds = array<i64: 1, 256>}, {pipeline_mode = #tpu.pipeline_mode<synchronous>, transform_indices = @transform_5, window_bounds = array<i64: 256, 128>}, {transform_indices = @transform_6, window_bounds = array<i64: 8, 128>}]} {
    %c0 = arith.constant 0 : index
    %c0_0 = arith.constant 0 : index
    %0 = vector.load %arg1[%c0, %c0_0] : memref<8x64xbf16, #tpu.memory_space<vmem>>, vector<8x64xbf16>
    %c0_1 = arith.constant 0 : index
    %c0_2 = arith.constant 0 : index
    %1 = vector.load %arg2[%c0_1, %c0_2] : memref<64x128xbf16, #tpu.memory_space<vmem>>, vector<64x128xbf16>
    %cst = arith.constant dense<0.000000e+00> : vector<8x128xf32>
    %2 = tpu.matmul %0, %1, %cst {dimension_numbers = #tpu.dot_dimension_numbers<[1], [0], [0], [1], [0, 0, 1, 1], [], []>} : vector<8x64xbf16>, vector<64x128xbf16>, vector<8x128xf32> -> vector<8x128xf32>
    %c0_3 = arith.constant 0 : index
    %c0_4 = arith.constant 0 : index
    %3 = vector.load %arg3[%c0_3, %c0_4] : memref<1x128xf32, #tpu.memory_space<vmem>>, vector<1x128xf32>
    %4 = vector.broadcast %3 : vector<1x128xf32> to vector<8x128xf32>
    %5 = arith.addf %2, %4 : vector<8x128xf32>
    %cst_5 = arith.constant 0.000000e+00 : f32
    %6 = vector.broadcast %cst_5 : f32 to vector<8x128xf32>
    %7 = arith.maximumf %5, %6 : vector<8x128xf32>
    %8 = arith.truncf %7 : vector<8x128xf32> to vector<8x128xbf16>
    %c0_6 = arith.constant 0 : index
    %c0_7 = arith.constant 0 : index
    %9 = vector.load %arg4[%c0_6, %c0_7] : memref<128x256xbf16, #tpu.memory_space<vmem>>, vector<128x256xbf16>
    %cst_8 = arith.constant dense<0.000000e+00> : vector<8x256xf32>
    %10 = tpu.matmul %8, %9, %cst_8 {dimension_numbers = #tpu.dot_dimension_numbers<[1], [0], [0], [1], [0, 0, 1, 1], [], []>} : vector<8x128xbf16>, vector<128x256xbf16>, vector<8x256xf32> -> vector<8x256xf32>
    %c0_9 = arith.constant 0 : index
    %c0_10 = arith.constant 0 : index
    %11 = vector.load %arg5[%c0_9, %c0_10] : memref<1x256xf32, #tpu.memory_space<vmem>>, vector<1x256xf32>
    %12 = vector.broadcast %11 : vector<1x256xf32> to vector<8x256xf32>
    %13 = arith.addf %10, %12 : vector<8x256xf32>
    %cst_11 = arith.constant 0.000000e+00 : f32
    %14 = vector.broadcast %cst_11 : f32 to vector<8x256xf32>
    %15 = arith.maximumf %13, %14 : vector<8x256xf32>
    %16 = arith.truncf %15 : vector<8x256xf32> to vector<8x256xbf16>
    %c0_12 = arith.constant 0 : index
    %c0_13 = arith.constant 0 : index
    %17 = vector.load %arg6[%c0_12, %c0_13] : memref<256x128xbf16, #tpu.memory_space<vmem>>, vector<256x128xbf16>
    %cst_14 = arith.constant dense<0.000000e+00> : vector<8x128xf32>
    %18 = tpu.matmul %16, %17, %cst_14 {dimension_numbers = #tpu.dot_dimension_numbers<[1], [0], [0], [1], [0, 0, 1, 1], [], []>} : vector<8x256xbf16>, vector<256x128xbf16>, vector<8x128xf32> -> vector<8x128xf32>
    %c0_15 = arith.constant 0 : index
    %c0_16 = arith.constant 0 : index
    %19 = vector.load %arg7[%c0_15, %c0_16] : memref<8x128xf32, #tpu.memory_space<vmem>>, vector<8x128xf32>
    tpu.vector_store %arg7[%c0_15, %c0_16], %18 {strides = array<i32>} : memref<8x128xf32, #tpu.memory_space<vmem>>, vector<8x128xf32>,
    return
  }
  func.func @transform_0(%arg0: i32) -> (i32, i32) {
    %c0_i32 = arith.constant 0 : i32
    %c0_i32_0 = arith.constant 0 : i32
    return %arg0, %c0_i32 : i32, i32
  }
  func.func @transform_1(%arg0: i32) -> (i32, i32) {
    %c0_i32 = arith.constant 0 : i32
    %c0_i32_0 = arith.constant 0 : i32
    %c0_i32_1 = arith.constant 0 : i32
    return %c0_i32, %c0_i32_0 : i32, i32
  }
  func.func @transform_2(%arg0: i32) -> (i32, i32) {
    %c0_i32 = arith.constant 0 : i32
    %c0_i32_0 = arith.constant 0 : i32
    %c0_i32_1 = arith.constant 0 : i32
    return %c0_i32, %c0_i32_0 : i32, i32
  }
  func.func @transform_3(%arg0: i32) -> (i32, i32) {
    %c0_i32 = arith.constant 0 : i32
    %c0_i32_0 = arith.constant 0 : i32
    %c0_i32_1 = arith.constant 0 : i32
    return %c0_i32, %c0_i32_0 : i32, i32
  }
  func.func @transform_4(%arg0: i32) -> (i32, i32) {
    %c0_i32 = arith.constant 0 : i32
    %c0_i32_0 = arith.constant 0 : i32
    %c0_i32_1 = arith.constant 0 : i32
    return %c0_i32, %c0_i32_0 : i32, i32
  }
  func.func @transform_5(%arg0: i32) -> (i32, i32) {
    %c0_i32 = arith.constant 0 : i32
    %c0_i32_0 = arith.constant 0 : i32
    %c0_i32_1 = arith.constant 0 : i32
    return %c0_i32, %c0_i32_0 : i32, i32
  }
  func.func @transform_6(%arg0: i32) -> (i32, i32) {
    %c0_i32 = arith.constant 0 : i32
    %c0_i32_0 = arith.constant 0 : i32
    return %arg0, %c0_i32 : i32, i32
  }
}

module attributes {stable_mosaic.version = 11 : i64} {
  func.func @_gap_kernel(%arg0: memref<2x4x128xf32, #tpu.memory_space<vmem>>, %arg1: memref<2x128xf32, #tpu.memory_space<vmem>>) attributes {dimension_semantics = [], scalar_prefetch = 0 : i64, scratch_operands = 0 : i64, tpu.core_type = #tpu.core_type<tc>} {
    %c0 = arith.constant 0 : index
    %c0_0 = arith.constant 0 : index
    %c0_1 = arith.constant 0 : index
    %0 = vector.load %arg0[%c0, %c0_0, %c0_1] : memref<2x4x128xf32, #tpu.memory_space<vmem>>, vector<2x4x128xf32>
    %cst = arith.constant dense<0.000000e+00> : vector<2x128xf32>
    %1 = vector.multi_reduction <add>, %0, %cst [1] : vector<2x4x128xf32> to vector<2x128xf32>
    %cst_2 = arith.constant 4.000000e+00 : f32
    %2 = vector.broadcast %cst_2 : f32 to vector<2x128xf32>
    %3 = arith.divf %1, %2 : vector<2x128xf32>
    %c0_3 = arith.constant 0 : index
    %c0_4 = arith.constant 0 : index
    %4 = vector.load %arg1[%c0_3, %c0_4] : memref<2x128xf32, #tpu.memory_space<vmem>>, vector<2x128xf32>
    tpu.vector_store %arg1[%c0_3, %c0_4], %3 {strides = array<i32>} : memref<2x128xf32, #tpu.memory_space<vmem>>, vector<2x128xf32>,
    return
  }
}

</mosaic_0001>

<llo_original>
// kernel: cam_and_logits.5
$region0: #{cam_and_logits.5}
  #allocation0 [shape = 'u32[]', space=smem, size = 0x4, offset = 0x4, fixed_abs, tag = 'smem constant byte address 0x4 - core index']
  #allocation1 [shape = 'u32[144,128]{1,0:T(1,128)}', space=vmem, size = 0x12000, scoped, tag = 'internal scratch']
  #allocation2 [shape = 'f32[32,64]{1,0:T(8,128)}', space=vmem, size = 0x4000, scoped, tag = 'scratch operand']
  %s0 = inlined_call_operand.vmem [shape: bf16[32,32], index: 0, kind: input, shape index: {}]
  %s1 = inlined_call_operand.vmem [shape: bf16[32,64], index: 1, kind: input, shape index: {}]
  %s2 = inlined_call_operand.vmem [shape: f32[1,64], index: 2, kind: input, shape index: {}]
  %s3 = inlined_call_operand.vmem [shape: bf16[32,64], index: 3, kind: output, shape index: {}]
  %s4 = sld [smem:[#allocation0]]
  $region30: #{cam_and_logits.5} parent=0
    _
  %s6 = ssub.s32 1, %s4
  %s7 = scalar_select 0, %s6, %s4
  // Predicated region
  $region2: #{cam_and_logits.5} parent=0 // pred_check
    _
  $region3: #{cam_and_logits.5} parent=0 // pred_check_branch
    %9 = sbr.rel (0) target = $region5
  $region4: #{cam_and_logits.5} parent=0 // pred_region
    _
  $region5: #{cam_and_logits.5} parent=0 // pred_fallthru
    _
  // Predicated region
  $region6: #{cam_and_logits.5} parent=0 // pred_check
    _
  $region7: #{cam_and_logits.5} parent=0 // pred_check_branch
    %11 = sbr.rel (0) target = $region9
  $region8: #{cam_and_logits.5} parent=0 // pred_region
    _
  $region9: #{cam_and_logits.5} parent=0 // pred_fallthru
    _
  // Predicated region
  $region10: #{cam_and_logits.5} parent=0 // pred_check
    _
  $region11: #{cam_and_logits.5} parent=0 // pred_check_branch
    %13 = sbr.rel (0) target = $region13
  $region12: #{cam_and_logits.5} parent=0 // pred_region
    _
  $region13: #{cam_and_logits.5} parent=0 // pred_fallthru
    _
  %p15 = scmp.eq.s32.totalorder 0, 0
  // Predicated region
  $region14: #{cam_and_logits.5} parent=0 // pred_check
    %p16 = pneg %p15
  $region15: #{cam_and_logits.5} parent=0 // pred_check_branch
    %18 = sbr.rel (%p16) target = $region17
  $region16: #{cam_and_logits.5} parent=0 // pred_region
    %vm19 = vcmask 523264
    %20 = vst.msk [vmem:[#allocation2] sm:$0xff] %vm19, 0.0
    %21 = vst.msk [vmem:[#allocation2 + $0x8] sm:$0xff] %vm19, 0.0
    %22 = vst.msk [vmem:[#allocation2 + $0x10] sm:$0xff] %vm19, 0.0
    %23 = vst.msk [vmem:[#allocation2 + $0x18] sm:$0xff] %vm19, 0.0
  $region17: #{cam_and_logits.5} parent=0 // pred_fallthru
    _
  %v24 = vld [vmem:[#allocation2] sm:$0xff]
  %v25 = vld [vmem:[#allocation2 + $0x8] sm:$0xff]
  %v26 = vld [vmem:[#allocation2 + $0x10] sm:$0xff]
  %v27 = vld [vmem:[#allocation2 + $0x18] sm:$0xff]
  %v28 = vld [vmem:[%s0] sm:$0xf]
  %v29 = vld [vmem:[%s0 + $0x4] sm:$0xf]
  %v30 = vld [vmem:[%s0 + $0x8] sm:$0xf]
  %v31 = vld [vmem:[%s0 + $0xc] sm:$0xf]
  %v32 = vld [vmem:[%s1] sm:$0xf]
  %v33 = vld [vmem:[%s1 + $0x4] sm:$0xf]
  %v34 = vld [vmem:[%s1 + $0x8] sm:$0xf]
  %v35 = vld [vmem:[%s1 + $0xc] sm:$0xf]
  %v40 = vunpack.c.l.b16 %v28
  %v41 = vunpack.c.l.b16 %v29
  %v42 = vunpack.c.l.b16 %v30
  %v43 = vunpack.c.l.b16 %v31
  %v44 = vpack.c.b16 %v41, %v40
  %v45 = vpack.c.b16 %v43, %v42
  %v50 = vunpack.c.l.b16 %v32
  %v51 = vunpack.c.l.b16 %v33
  %v52 = vunpack.c.l.b16 %v34
  %v53 = vunpack.c.l.b16 %v35
  %v54 = vpack.c.b16 %v51, %v50
  %v55 = vpack.c.b16 %v53, %v52
  %vm58 = vcmask 261120
  %v60 = vsel %vm58, %v44, 0
  %v63 = vsel %vm58, %v45, 0
  %65 = vmatprep.subr.bf16.mxu0 0
  %66 = vmatpush1.bf16.msra.mxu0 0
  %67 = vmatprep.subr.bf16.mxu0 0
  %68 = vmatpush1.bf16.msra.mxu0 0
  %69 = vmatprep.subr.bf16.mxu0 0
  %70 = vmatpush1.bf16.msra.mxu0 0
  %71 = vmatprep.subr.bf16.mxu0 0
  %72 = vmatpush1.bf16.msra.mxu0 0
  %73 = vmatprep.subr.bf16.mxu0 0
  %74 = vmatpush1.bf16.msra.mxu0 0
  %75 = vmatprep.subr.bf16.mxu0 0
  %76 = vmatpush1.bf16.msra.mxu0 0
  %77 = vmatprep.subr.bf16.mxu0 0
  %78 = vmatpush1.bf16.msra.mxu0 %v55
  %79 = vmatprep.subr.bf16.mxu0 0
  %80 = vmatpush1.bf16.msra.mxu0 %v54
  %81 = vmatprep.subr.bf16.mxu0 0
  %82 = vmatpush2.bf16.msra.mxu0 0
  %83 = vmatprep.subr.bf16.mxu0 0
  %84 = vmatpush2.bf16.msra.mxu0 0
  %85 = vmatprep.subr.bf16.mxu0 0
  %86 = vmatpush2.bf16.msra.mxu0 0
  %87 = vmatprep.subr.bf16.mxu0 0
  %88 = vmatpush2.bf16.msra.mxu0 0
  %89 = vmatprep.subr.bf16.mxu0 0
  %90 = vmatpush2.bf16.msra.mxu0 0
  %91 = vmatprep.subr.bf16.mxu0 0
  %92 = vmatpush2.bf16.msra.mxu0 0
  %93 = vmatprep.subr.bf16.mxu0 0
  %94 = vmatpush2.bf16.msra.mxu0 0
  %95 = vmatprep.subr.bf16.mxu0 0
  %96 = vmatpush2.bf16.msra.mxu0 0
  %97 = vmatprep.mubr.bf16.mxu0 0
  %98 = vmatmul.mubr.bf16.gmra.mxu0 %v60
  %v99 = vpop.f32.mrf.mxu0
  %v100 = vadd.f32 0.0, %v99
  %v101 = vpop.f32.mrf.mxu0
  %v102 = vpop.f32.mrf.mxu0
  %v103 = vadd.f32 0.0, %v102
  %v104 = vpop.f32.mrf.mxu0
  %105 = vmatprep.mubr.bf16.mxu0 0
  %106 = vmatmul.mubr.bf16.gmra.mxu0 %v63
  %v107 = vpop.f32.mrf.mxu0
  %v108 = vadd.f32 0.0, %v107
  %v109 = vpop.f32.mrf.mxu0
  %v110 = vpop.f32.mrf.mxu0
  %v111 = vadd.f32 0.0, %v110
  %v112 = vpop.f32.mrf.mxu0
  %113 = vdwg.mxu0
  %v114 = vadd.f32 %v24, %v100
  %v115 = vadd.f32 %v25, %v103
  %v116 = vadd.f32 %v26, %v108
  %v117 = vadd.f32 %v27, %v111
  %vm118 = vcmask 523264
  %119 = vst.msk [vmem:[#allocation2] sm:$0xff] %vm118, %v114
  %120 = vst.msk [vmem:[#allocation2 + $0x8] sm:$0xff] %vm118, %v115
  %121 = vst.msk [vmem:[#allocation2 + $0x10] sm:$0xff] %vm118, %v116
  %122 = vst.msk [vmem:[#allocation2 + $0x18] sm:$0xff] %vm118, %v117
  // Predicated region
  $region18: #{cam_and_logits.5} parent=0 // pred_check
    %p123 = pneg %p15
  $region19: #{cam_and_logits.5} parent=0 // pred_check_branch
    %125 = sbr.rel (%p123) target = $region21
  $region20: #{cam_and_logits.5} parent=0 // pred_region
    %v126 = vld [vmem:[#allocation2] sm:$0xff]
    %v127 = vld [vmem:[#allocation2 + $0x8] sm:$0xff]
    %v128 = vld [vmem:[#allocation2 + $0x10] sm:$0xff]
    %v129 = vld [vmem:[#allocation2 + $0x18] sm:$0xff]
    %v130 = vld [vmem:[%s2] sm:$0x1]
    %v132 = vlaneseq
    %v133 = vshrl.u32 %v132, 7
    %v134 = vsub.s32 0, %v133
    %v135 = vrot.slane %v130, %v134
    %v137 = vadd.f32 %v126, %v135
    %v138 = vadd.f32 %v127, %v135
    %v139 = vadd.f32 %v128, %v135
    %v140 = vadd.f32 %v129, %v135
    %v141 = vmax.f32 %v137, 0.0
    %v142 = vmax.f32 %v138, 0.0
    %v143 = vmax.f32 %v139, 0.0
    %v144 = vmax.f32 %v140, 0.0
    %v145 = vpack.c.bf16 %v142, %v141
    %v146 = vpack.c.bf16 %v144, %v143
    %v149 = vunpack.c.l.b16 %v145
    %v150 = vunpack.c.h.b16 %v145
    %v151 = vunpack.c.l.b16 %v146
    %v152 = vunpack.c.h.b16 %v146
    %v153 = vpack.c.b16 %v149, %v149
    %v154 = vpack.c.b16 %v150, %v150
    %v155 = vpack.c.b16 %v151, %v151
    %v156 = vpack.c.b16 %v152, %v152
    %vm161 = vcmask 519168
    %162 = vst.msk [vmem:[%s3] sm:$0xf] %vm161, %v153
    %163 = vst.msk [vmem:[%s3 + $0x4] sm:$0xf] %vm161, %v154
    %164 = vst.msk [vmem:[%s3 + $0x8] sm:$0xf] %vm161, %v155
    %165 = vst.msk [vmem:[%s3 + $0xc] sm:$0xf] %vm161, %v156
  $region21: #{cam_and_logits.5} parent=0 // pred_fallthru
    _
  // Predicated region
  $region22: #{cam_and_logits.5} parent=0 // pred_check
    _
  $region23: #{cam_and_logits.5} parent=0 // pred_check_branch
    %167 = sbr.rel (0) target = $region25
  $region24: #{cam_and_logits.5} parent=0 // pred_region
    _
  $region25: #{cam_and_logits.5} parent=0 // pred_fallthru
    _
  // Predicated region
  $region26: #{cam_and_logits.5} parent=0 // pred_check
    _
  $region27: #{cam_and_logits.5} parent=0 // pred_check_branch
    %169 = sbr.rel (0) target = $region29
  $region28: #{cam_and_logits.5} parent=0 // pred_region
    _
  $region29: #{cam_and_logits.5} parent=0 // pred_fallthru
    _

// kernel: cam_and_logits.4
$region0: #{cam_and_logits.4}
  #allocation0 [shape = 'u32[]', space=smem, size = 0x4, offset = 0x4, fixed_abs, tag = 'smem constant byte address 0x4 - core index']
  #allocation1 [shape = 'u32[144,128]{1,0:T(1,128)}', space=vmem, size = 0x12000, scoped, tag = 'internal scratch']
  #allocation2 [shape = 'f32[128,32]{1,0:T(8,128)}', space=vmem, size = 0x10000, scoped, tag = 'scratch operand']
  %s0 = inlined_call_operand.vmem [shape: bf16[128,48], index: 0, kind: input, shape index: {}]
  %s1 = inlined_call_operand.vmem [shape: bf16[48,32], index: 1, kind: input, shape index: {}]
  %s2 = inlined_call_operand.vmem [shape: f32[1,32], index: 2, kind: input, shape index: {}]
  %s3 = inlined_call_operand.vmem [shape: bf16[128,32], index: 3, kind: output, shape index: {}]
  %s4 = sld [smem:[#allocation0]]
  $region30: #{cam_and_logits.4} parent=0
    _
  %s6 = ssub.s32 1, %s4
  %s7 = scalar_select 0, %s6, %s4
  // Predicated region
  $region2: #{cam_and_logits.4} parent=0 // pred_check
    _
  $region3: #{cam_and_logits.4} parent=0 // pred_check_branch
    %9 = sbr.rel (0) target = $region5
  $region4: #{cam_and_logits.4} parent=0 // pred_region
    _
  $region5: #{cam_and_logits.4} parent=0 // pred_fallthru
    _
  // Predicated region
  $region6: #{cam_and_logits.4} parent=0 // pred_check
    _
  $region7: #{cam_and_logits.4} parent=0 // pred_check_branch
    %11 = sbr.rel (0) target = $region9
  $region8: #{cam_and_logits.4} parent=0 // pred_region
    _
  $region9: #{cam_and_logits.4} parent=0 // pred_fallthru
    _
  // Predicated region
  $region10: #{cam_and_logits.4} parent=0 // pred_check
    _
  $region11: #{cam_and_logits.4} parent=0 // pred_check_branch
    %13 = sbr.rel (0) target = $region13
  $region12: #{cam_and_logits.4} parent=0 // pred_region
    _
  $region13: #{cam_and_logits.4} parent=0 // pred_fallthru
    _
  %p15 = scmp.eq.s32.totalorder 0, 0
  // Predicated region
  $region14: #{cam_and_logits.4} parent=0 // pred_check
    %p16 = pneg %p15
  $region15: #{cam_and_logits.4} parent=0 // pred_check_branch
    %18 = sbr.rel (%p16) target = $region17
  $region16: #{cam_and_logits.4} parent=0 // pred_region
    %vm19 = vcmask 261120
    %20 = vst.msk [vmem:[#allocation2] sm:$0xff] %vm19, 0.0
    %21 = vst.msk [vmem:[#allocation2 + $0x8] sm:$0xff] %vm19, 0.0
    %22 = vst.msk [vmem:[#allocation2 + $0x10] sm:$0xff] %vm19, 0.0
    %23 = vst.msk [vmem:[#allocation2 + $0x18] sm:$0xff] %vm19, 0.0
    %24 = vst.msk [vmem:[#allocation2 + $0x20] sm:$0xff] %vm19, 0.0
    %25 = vst.msk [vmem:[#allocation2 + $0x28] sm:$0xff] %vm19, 0.0
    %26 = vst.msk [vmem:[#allocation2 + $0x30] sm:$0xff] %vm19, 0.0
    %27 = vst.msk [vmem:[#allocation2 + $0x38] sm:$0xff] %vm19, 0.0
    %28 = vst.msk [vmem:[#allocation2 + $0x40] sm:$0xff] %vm19, 0.0
    %29 = vst.msk [vmem:[#allocation2 + $0x48] sm:$0xff] %vm19, 0.0
    %30 = vst.msk [vmem:[#allocation2 + $0x50] sm:$0xff] %vm19, 0.0
    %31 = vst.msk [vmem:[#allocation2 + $0x58] sm:$0xff] %vm19, 0.0
    %32 = vst.msk [vmem:[#allocation2 + $0x60] sm:$0xff] %vm19, 0.0
    %33 = vst.msk [vmem:[#allocation2 + $0x68] sm:$0xff] %vm19, 0.0
    %34 = vst.msk [vmem:[#allocation2 + $0x70] sm:$0xff] %vm19, 0.0
    %35 = vst.msk [vmem:[#allocation2 + $0x78] sm:$0xff] %vm19, 0.0
  $region17: #{cam_and_logits.4} parent=0 // pred_fallthru
    _
  %v36 = vld [vmem:[#allocation2] sm:$0xff]
  %v37 = vld [vmem:[#allocation2 + $0x8] sm:$0xff]
  %v38 = vld [vmem:[#allocation2 + $0x10] sm:$0xff]
  %v39 = vld [vmem:[#allocation2 + $0x18] sm:$0xff]
  %v40 = vld [vmem:[#allocation2 + $0x20] sm:$0xff]
  %v41 = vld [vmem:[#allocation2 + $0x28] sm:$0xff]
  %v42 = vld [vmem:[#allocation2 + $0x30] sm:$0xff]
  %v43 = vld [vmem:[#allocation2 + $0x38] sm:$0xff]
  %v44 = vld [vmem:[#allocation2 + $0x40] sm:$0xff]
  %v45 = vld [vmem:[#allocation2 + $0x48] sm:$0xff]
  %v46 = vld [vmem:[#allocation2 + $0x50] sm:$0xff]
  %v47 = vld [vmem:[#allocation2 + $0x58] sm:$0xff]
  %v48 = vld [vmem:[#allocation2 + $0x60] sm:$0xff]
  %v49 = vld [vmem:[#allocation2 + $0x68] sm:$0xff]
  %v50 = vld [vmem:[#allocation2 + $0x70] sm:$0xff]
  %v51 = vld [vmem:[#allocation2 + $0x78] sm:$0xff]
  %v52 = vld [vmem:[%s0] sm:$0xf]
  %v53 = vld [vmem:[%s0 + $0x4] sm:$0xf]
  %v54 = vld [vmem:[%s0 + $0x8] sm:$0xf]
  %v55 = vld [vmem:[%s0 + $0xc] sm:$0xf]
  %v56 = vld [vmem:[%s0 + $0x10] sm:$0xf]
  %v57 = vld [vmem:[%s0 + $0x14] sm:$0xf]
  %v58 = vld [vmem:[%s0 + $0x18] sm:$0xf]
  %v59 = vld [vmem:[%s0 + $0x1c] sm:$0xf]
  %v60 = vld [vmem:[%s0 + $0x20] sm:$0xf]
  %v61 = vld [vmem:[%s0 + $0x24] sm:$0xf]
  %v62 = vld [vmem:[%s0 + $0x28] sm:$0xf]
  %v63 = vld [vmem:[%s0 + $0x2c] sm:$0xf]
  %v64 = vld [vmem:[%s0 + $0x30] sm:$0xf]
  %v65 = vld [vmem:[%s0 + $0x34] sm:$0xf]
  %v66 = vld [vmem:[%s0 + $0x38] sm:$0xf]
  %v67 = vld [vmem:[%s0 + $0x3c] sm:$0xf]
  %v68 = vld [vmem:[%s1] sm:$0xf]
  %v69 = vld [vmem:[%s1 + $0x4] sm:$0xf]
  %v70 = vld [vmem:[%s1 + $0x8] sm:$0xf]
  %v71 = vld [vmem:[%s1 + $0xc] sm:$0xf]
  %v72 = vld [vmem:[%s1 + $0x10] sm:$0xf]
  %v73 = vld [vmem:[%s1 + $0x14] sm:$0xf]
  %v90 = vunpack.c.l.b16 %v52
  %v91 = vunpack.c.l.b16 %v53
  %v92 = vunpack.c.l.b16 %v54
  %v93 = vunpack.c.l.b16 %v55
  %v94 = vunpack.c.l.b16 %v56
  %v95 = vunpack.c.l.b16 %v57
  %v96 = vunpack.c.l.b16 %v58
  %v97 = vunpack.c.l.b16 %v59
  %v98 = vunpack.c.l.b16 %v60
  %v99 = vunpack.c.l.b16 %v61
  %v100 = vunpack.c.l.b16 %v62
  %v101 = vunpack.c.l.b16 %v63
  %v102 = vunpack.c.l.b16 %v64
  %v103 = vunpack.c.l.b16 %v65
  %v104 = vunpack.c.l.b16 %v66
  %v105 = vunpack.c.l.b16 %v67
  %v106 = vpack.c.b16 %v91, %v90
  %v107 = vpack.c.b16 %v93, %v92
  %v108 = vpack.c.b16 %v95, %v94
  %v109 = vpack.c.b16 %v97, %v96
  %v110 = vpack.c.b16 %v99, %v98
  %v111 = vpack.c.b16 %v101, %v100
  %v112 = vpack.c.b16 %v103, %v102
  %v113 = vpack.c.b16 %v105, %v104
  %v120 = vunpack.c.l.b16 %v68
  %v121 = vunpack.c.l.b16 %v69
  %v122 = vunpack.c.l.b16 %v70
  %v123 = vunpack.c.l.b16 %v71
  %v124 = vunpack.c.l.b16 %v72
  %v125 = vunpack.c.l.b16 %v73
  %v126 = vpack.c.b16 %v121, %v120
  %v127 = vpack.c.b16 %v123, %v122
  %v128 = vpack.c.b16 %v125, %v124
  %vm132 = vcmask 392192
  %v134 = vsel %vm132, %v106, 0
  %v137 = vsel %vm132, %v107, 0
  %v140 = vsel %vm132, %v108, 0
  %v143 = vsel %vm132, %v109, 0
  %v146 = vsel %vm132, %v110, 0
  %v149 = vsel %vm132, %v111, 0
  %v152 = vsel %vm132, %v112, 0
  %v155 = vsel %vm132, %v113, 0
  %157 = vmatprep.subr.bf16.mxu0 0
  %158 = vmatpush1.bf16.msra.mxu0 0
  %159 = vmatprep.subr.bf16.mxu0 0
  %160 = vmatpush1.bf16.msra.mxu0 0
  %161 = vmatprep.subr.bf16.mxu0 0
  %162 = vmatpush1.bf16.msra.mxu0 0
  %163 = vmatprep.subr.bf16.mxu0 0
  %164 = vmatpush1.bf16.msra.mxu0 0
  %165 = vmatprep.subr.bf16.mxu0 0
  %166 = vmatpush1.bf16.msra.mxu0 0
  %167 = vmatprep.subr.bf16.mxu0 0
  %168 = vmatpush1.bf16.msra.mxu0 %v128
  %169 = vmatprep.subr.bf16.mxu0 0
  %170 = vmatpush1.bf16.msra.mxu0 %v127
  %171 = vmatprep.subr.bf16.mxu0 0
  %172 = vmatpush1.bf16.msra.mxu0 %v126
  %173 = vmatprep.subr.bf16.mxu0 0
  %174 = vmatpush2.bf16.msra.mxu0 0
  %175 = vmatprep.subr.bf16.mxu0 0
  %176 = vmatpush2.bf16.msra.mxu0 0
  %177 = vmatprep.subr.bf16.mxu0 0
  %178 = vmatpush2.bf16.msra.mxu0 0
  %179 = vmatprep.subr.bf16.mxu0 0
  %180 = vmatpush2.bf16.msra.mxu0 0
  %181 = vmatprep.subr.bf16.mxu0 0
  %182 = vmatpush2.bf16.msra.mxu0 0
  %183 = vmatprep.subr.bf16.mxu0 0
  %184 = vmatpush2.bf16.msra.mxu0 0
  %185 = vmatprep.subr.bf16.mxu0 0
  %186 = vmatpush2.bf16.msra.mxu0 0
  %187 = vmatprep.subr.bf16.mxu0 0
  %188 = vmatpush2.bf16.msra.mxu0 0
  %189 = vmatprep.mubr.bf16.mxu0 0
  %190 = vmatmul.mubr.bf16.gmra.mxu0 %v134
  %v191 = vpop.f32.mrf.mxu0
  %v192 = vadd.f32 0.0, %v191
  %v193 = vpop.f32.mrf.mxu0
  %v194 = vpop.f32.mrf.mxu0
  %v195 = vadd.f32 0.0, %v194
  %v196 = vpop.f32.mrf.mxu0
  %197 = vmatprep.mubr.bf16.mxu0 0
  %198 = vmatmul.mubr.bf16.gmra.mxu0 %v137
  %v199 = vpop.f32.mrf.mxu0
  %v200 = vadd.f32 0.0, %v199
  %v201 = vpop.f32.mrf.mxu0
  %v202 = vpop.f32.mrf.mxu0
  %v203 = vadd.f32 0.0, %v202
  %v204 = vpop.f32.mrf.mxu0
  %205 = vmatprep.mubr.bf16.mxu0 0
  %206 = vmatmul.mubr.bf16.gmra.mxu0 %v140
  %v207 = vpop.f32.mrf.mxu0
  %v208 = vadd.f32 0.0, %v207
  %v209 = vpop.f32.mrf.mxu0
  %v210 = vpop.f32.mrf.mxu0
  %v211 = vadd.f32 0.0, %v210
  %v212 = vpop.f32.mrf.mxu0
  %213 = vmatprep.mubr.bf16.mxu0 0
  %214 = vmatmul.mubr.bf16.gmra.mxu0 %v143
  %v215 = vpop.f32.mrf.mxu0
  %v216 = vadd.f32 0.0, %v215
  %v217 = vpop.f32.mrf.mxu0
  %v218 = vpop.f32.mrf.mxu0
  %v219 = vadd.f32 0.0, %v218
  %v220 = vpop.f32.mrf.mxu0
  %221 = vmatprep.mubr.bf16.mxu0 0
  %222 = vmatmul.mubr.bf16.gmra.mxu0 %v146
  %v223 = vpop.f32.mrf.mxu0
  %v224 = vadd.f32 0.0, %v223
  %v225 = vpop.f32.mrf.mxu0
  %v226 = vpop.f32.mrf.mxu0
  %v227 = vadd.f32 0.0, %v226
  %v228 = vpop.f32.mrf.mxu0
  %229 = vmatprep.mubr.bf16.mxu0 0
  %230 = vmatmul.mubr.bf16.gmra.mxu0 %v149
  %v231 = vpop.f32.mrf.mxu0
  %v232 = vadd.f32 0.0, %v231
  %v233 = vpop.f32.mrf.mxu0
  %v234 = vpop.f32.mrf.mxu0
  %v235 = vadd.f32 0.0, %v234
  %v236 = vpop.f32.mrf.mxu0
  %237 = vmatprep.mubr.bf16.mxu0 0
  %238 = vmatmul.mubr.bf16.gmra.mxu0 %v152
  %v239 = vpop.f32.mrf.mxu0
  %v240 = vadd.f32 0.0, %v239
  %v241 = vpop.f32.mrf.mxu0
  %v242 = vpop.f32.mrf.mxu0
  %v243 = vadd.f32 0.0, %v242
  %v244 = vpop.f32.mrf.mxu0
  %245 = vmatprep.mubr.bf16.mxu0 0
  %246 = vmatmul.mubr.bf16.gmra.mxu0 %v155
  %v247 = vpop.f32.mrf.mxu0
  %v248 = vadd.f32 0.0, %v247
  %v249 = vpop.f32.mrf.mxu0
  %v250 = vpop.f32.mrf.mxu0
  %v251 = vadd.f32 0.0, %v250
  %v252 = vpop.f32.mrf.mxu0
  %253 = vdwg.mxu0
  %v254 = vadd.f32 %v36, %v192
  %v255 = vadd.f32 %v37, %v195
  %v256 = vadd.f32 %v38, %v200
  %v257 = vadd.f32 %v39, %v203
  %v258 = vadd.f32 %v40, %v208
  %v259 = vadd.f32 %v41, %v211
  %v260 = vadd.f32 %v42, %v216
  %v261 = vadd.f32 %v43, %v219
  %v262 = vadd.f32 %v44, %v224
  %v263 = vadd.f32 %v45, %v227
  %v264 = vadd.f32 %v46, %v232
  %v265 = vadd.f32 %v47, %v235
  %v266 = vadd.f32 %v48, %v240
  %v267 = vadd.f32 %v49, %v243
  %v268 = vadd.f32 %v50, %v248
  %v269 = vadd.f32 %v51, %v251
  %vm270 = vcmask 261120
  %271 = vst.msk [vmem:[#allocation2] sm:$0xff] %vm270, %v254
  %272 = vst.msk [vmem:[#allocation2 + $0x8] sm:$0xff] %vm270, %v255
  %273 = vst.msk [vmem:[#allocation2 + $0x10] sm:$0xff] %vm270, %v256
  %274 = vst.msk [vmem:[#allocation2 + $0x18] sm:$0xff] %vm270, %v257
  %275 = vst.msk [vmem:[#allocation2 + $0x20] sm:$0xff] %vm270, %v258
  %276 = vst.msk [vmem:[#allocation2 + $0x28] sm:$0xff] %vm270, %v259
  %277 = vst.msk [vmem:[#allocation2 + $0x30] sm:$0xff] %vm270, %v260
  %278 = vst.msk [vmem:[#allocation2 + $0x38] sm:$0xff] %vm270, %v261
  %279 = vst.msk [vmem:[#allocation2 + $0x40] sm:$0xff] %vm270, %v262
  %280 = vst.msk [vmem:[#allocation2 + $0x48] sm:$0xff] %vm270, %v263
  %281 = vst.msk [vmem:[#allocation2 + $0x50] sm:$0xff] %vm270, %v264
  %282 = vst.msk [vmem:[#allocation2 + $0x58] sm:$0xff] %vm270, %v265
  %283 = vst.msk [vmem:[#allocation2 + $0x60] sm:$0xff] %vm270, %v266
  %284 = vst.msk [vmem:[#allocation2 + $0x68] sm:$0xff] %vm270, %v267
  %285 = vst.msk [vmem:[#allocation2 + $0x70] sm:$0xff] %vm270, %v268
  %286 = vst.msk [vmem:[#allocation2 + $0x78] sm:$0xff] %vm270, %v269
  // Predicated region
  $region18: #{cam_and_logits.4} parent=0 // pred_check
    %p287 = pneg %p15
  $region19: #{cam_and_logits.4} parent=0 // pred_check_branch
    %289 = sbr.rel (%p287) target = $region21
  $region20: #{cam_and_logits.4} parent=0 // pred_region
    %v290 = vld [vmem:[#allocation2] sm:$0xff]
    %v291 = vld [vmem:[#allocation2 + $0x8] sm:$0xff]
    %v292 = vld [vmem:[#allocation2 + $0x10] sm:$0xff]
    %v293 = vld [vmem:[#allocation2 + $0x18] sm:$0xff]
    %v294 = vld [vmem:[#allocation2 + $0x20] sm:$0xff]
    %v295 = vld [vmem:[#allocation2 + $0x28] sm:$0xff]
    %v296 = vld [vmem:[#allocation2 + $0x30] sm:$0xff]
    %v297 = vld [vmem:[#allocation2 + $0x38] sm:$0xff]
    %v298 = vld [vmem:[#allocation2 + $0x40] sm:$0xff]
    %v299 = vld [vmem:[#allocation2 + $0x48] sm:$0xff]
    %v300 = vld [vmem:[#allocation2 + $0x50] sm:$0xff]
    %v301 = vld [vmem:[#allocation2 + $0x58] sm:$0xff]
    %v302 = vld [vmem:[#allocation2 + $0x60] sm:$0xff]
    %v303 = vld [vmem:[#allocation2 + $0x68] sm:$0xff]
    %v304 = vld [vmem:[#allocation2 + $0x70] sm:$0xff]
    %v305 = vld [vmem:[#allocation2 + $0x78] sm:$0xff]
    %v306 = vld [vmem:[%s2] sm:$0x1]
    %v308 = vlaneseq
    %v309 = vshrl.u32 %v308, 7
    %v310 = vsub.s32 0, %v309
    %v311 = vrot.slane %v306, %v310
    %v313 = vadd.f32 %v290, %v311
    %v314 = vadd.f32 %v291, %v311
    %v315 = vadd.f32 %v292, %v311
    %v316 = vadd.f32 %v293, %v311
    %v317 = vadd.f32 %v294, %v311
    %v318 = vadd.f32 %v295, %v311
    %v319 = vadd.f32 %v296, %v311
    %v320 = vadd.f32 %v297, %v311
    %v321 = vadd.f32 %v298, %v311
    %v322 = vadd.f32 %v299, %v311
    %v323 = vadd.f32 %v300, %v311
    %v324 = vadd.f32 %v301, %v311
    %v325 = vadd.f32 %v302, %v311
    %v326 = vadd.f32 %v303, %v311
    %v327 = vadd.f32 %v304, %v311
    %v328 = vadd.f32 %v305, %v311
    %v329 = vmax.f32 %v313, 0.0
    %v330 = vmax.f32 %v314, 0.0
    %v331 = vmax.f32 %v315, 0.0
    %v332 = vmax.f32 %v316, 0.0
    %v333 = vmax.f32 %v317, 0.0
    %v334 = vmax.f32 %v318, 0.0
    %v335 = vmax.f32 %v319, 0.0
    %v336 = vmax.f32 %v320, 0.0
    %v337 = vmax.f32 %v321, 0.0
    %v338 = vmax.f32 %v322, 0.0
    %v339 = vmax.f32 %v323, 0.0
    %v340 = vmax.f32 %v324, 0.0
    %v341 = vmax.f32 %v325, 0.0
    %v342 = vmax.f32 %v326, 0.0
    %v343 = vmax.f32 %v327, 0.0
    %v344 = vmax.f32 %v328, 0.0
    %v345 = vpack.c.bf16 %v330, %v329
    %v346 = vpack.c.bf16 %v332, %v331
    %v347 = vpack.c.bf16 %v334, %v333
    %v348 = vpack.c.bf16 %v336, %v335
    %v349 = vpack.c.bf16 %v338, %v337
    %v350 = vpack.c.bf16 %v340, %v339
    %v351 = vpack.c.bf16 %v342, %v341
    %v352 = vpack.c.bf16 %v344, %v343
    %v361 = vunpack.c.l.b16 %v345
    %v362 = vunpack.c.h.b16 %v345
    %v363 = vunpack.c.l.b16 %v346
    %v364 = vunpack.c.h.b16 %v346
    %v365 = vunpack.c.l.b16 %v347
    %v366 = vunpack.c.h.b16 %v347
    %v367 = vunpack.c.l.b16 %v348
    %v368 = vunpack.c.h.b16 %v348
    %v369 = vunpack.c.l.b16 %v349
    %v370 = vunpack.c.h.b16 %v349
    %v371 = vunpack.c.l.b16 %v350
    %v372 = vunpack.c.h.b16 %v350
    %v373 = vunpack.c.l.b16 %v351
    %v374 = vunpack.c.h.b16 %v351
    %v375 = vunpack.c.l.b16 %v352
    %v376 = vunpack.c.h.b16 %v352
    %v377 = vpack.c.b16 %v361, %v361
    %v378 = vpack.c.b16 %v362, %v362
    %v379 = vpack.c.b16 %v363, %v363
    %v380 = vpack.c.b16 %v364, %v364
    %v381 = vpack.c.b16 %v365, %v365
    %v382 = vpack.c.b16 %v366, %v366
    %v383 = vpack.c.b16 %v367, %v367
    %v384 = vpack.c.b16 %v368, %v368
    %v385 = vpack.c.b16 %v369, %v369
    %v386 = vpack.c.b16 %v370, %v370
    %v387 = vpack.c.b16 %v371, %v371
    %v388 = vpack.c.b16 %v372, %v372
    %v389 = vpack.c.b16 %v373, %v373
    %v390 = vpack.c.b16 %v374, %v374
    %v391 = vpack.c.b16 %v375, %v375
    %v392 = vpack.c.b16 %v376, %v376
    %vm409 = vcmask 257024
    %410 = vst.msk [vmem:[%s3] sm:$0xf] %vm409, %v377
    %411 = vst.msk [vmem:[%s3 + $0x4] sm:$0xf] %vm409, %v378
    %412 = vst.msk [vmem:[%s3 + $0x8] sm:$0xf] %vm409, %v379
    %413 = vst.msk [vmem:[%s3 + $0xc] sm:$0xf] %vm409, %v380
    %414 = vst.msk [vmem:[%s3 + $0x10] sm:$0xf] %vm409, %v381
    %415 = vst.msk [vmem:[%s3 + $0x14] sm:$0xf] %vm409, %v382
    %416 = vst.msk [vmem:[%s3 + $0x18] sm:$0xf] %vm409, %v383
    %417 = vst.msk [vmem:[%s3 + $0x1c] sm:$0xf] %vm409, %v384
    %418 = vst.msk [vmem:[%s3 + $0x20] sm:$0xf] %vm409, %v385
    %419 = vst.msk [vmem:[%s3 + $0x24] sm:$0xf] %vm409, %v386
    %420 = vst.msk [vmem:[%s3 + $0x28] sm:$0xf] %vm409, %v387
    %421 = vst.msk [vmem:[%s3 + $0x2c] sm:$0xf] %vm409, %v388
    %422 = vst.msk [vmem:[%s3 + $0x30] sm:$0xf] %vm409, %v389
    %423 = vst.msk [vmem:[%s3 + $0x34] sm:$0xf] %vm409, %v390
    %424 = vst.msk [vmem:[%s3 + $0x38] sm:$0xf] %vm409, %v391
    %425 = vst.msk [vmem:[%s3 + $0x3c] sm:$0xf] %vm409, %v392
  $region21: #{cam_and_logits.4} parent=0 // pred_fallthru
    _
  // Predicated region
  $region22: #{cam_and_logits.4} parent=0 // pred_check
    _
  $region23: #{cam_and_logits.4} parent=0 // pred_check_branch
    %427 = sbr.rel (0) target = $region25
  $region24: #{cam_and_logits.4} parent=0 // pred_region
    _
  $region25: #{cam_and_logits.4} parent=0 // pred_fallthru
    _
  // Predicated region
  $region26: #{cam_and_logits.4} parent=0 // pred_check
    _
  $region27: #{cam_and_logits.4} parent=0 // pred_check_branch
    %429 = sbr.rel (0) target = $region29
  $region28: #{cam_and_logits.4} parent=0 // pred_region
    _
  $region29: #{cam_and_logits.4} parent=0 // pred_fallthru
    _

// kernel: cam_and_logits.6
$region0: #{cam_and_logits.6}
  #allocation0 [shape = 'u32[]', space=smem, size = 0x4, offset = 0x4, fixed_abs, tag = 'smem constant byte address 0x4 - core index']
  #allocation1 [shape = 'u32[144,128]{1,0:T(1,128)}', space=vmem, size = 0x12000, scoped, tag = 'internal scratch']
  %s0 = inlined_call_operand.vmem [shape: bf16[8,64], index: 0, kind: input, shape index: {}]
  %s1 = inlined_call_operand.vmem [shape: bf16[64,128], index: 1, kind: input, shape index: {}]
  %s2 = inlined_call_operand.vmem [shape: f32[1,128], index: 2, kind: input, shape index: {}]
  %s3 = inlined_call_operand.vmem [shape: bf16[128,256], index: 3, kind: input, shape index: {}]
  %s4 = inlined_call_operand.vmem [shape: f32[1,256], index: 4, kind: input, shape index: {}]
  %s5 = inlined_call_operand.vmem [shape: bf16[256,128], index: 5, kind: input, shape index: {}]
  %s6 = inlined_call_operand.vmem [shape: f32[8,128], index: 6, kind: output, shape index: {}]
  %s7 = sld [smem:[#allocation0]]
  $region34: #{cam_and_logits.6} parent=0
    _
  %s9 = ssub.s32 1, %s7
  %s10 = scalar_select 0, %s9, %s7
  // Predicated region
  $region2: #{cam_and_logits.6} parent=0 // pred_check
    _
  $region3: #{cam_and_logits.6} parent=0 // pred_check_branch
    %12 = sbr.rel (0) target = $region5
  $region4: #{cam_and_logits.6} parent=0 // pred_region
    _
  $region5: #{cam_and_logits.6} parent=0 // pred_fallthru
    _
  // Predicated region
  $region6: #{cam_and_logits.6} parent=0 // pred_check
    _
  $region7: #{cam_and_logits.6} parent=0 // pred_check_branch
    %14 = sbr.rel (0) target = $region9
  $region8: #{cam_and_logits.6} parent=0 // pred_region
    _
  $region9: #{cam_and_logits.6} parent=0 // pred_fallthru
    _
  // Predicated region
  $region10: #{cam_and_logits.6} parent=0 // pred_check
    _
  $region11: #{cam_and_logits.6} parent=0 // pred_check_branch
    %16 = sbr.rel (0) target = $region13
  $region12: #{cam_and_logits.6} parent=0 // pred_region
    _
  $region13: #{cam_and_logits.6} parent=0 // pred_fallthru
    _
  // Predicated region
  $region14: #{cam_and_logits.6} parent=0 // pred_check
    _
  $region15: #{cam_and_logits.6} parent=0 // pred_check_branch
    %18 = sbr.rel (0) target = $region17
  $region16: #{cam_and_logits.6} parent=0 // pred_region
    _
  $region17: #{cam_and_logits.6} parent=0 // pred_fallthru
    _
  // Predicated region
  $region18: #{cam_and_logits.6} parent=0 // pred_check
    _
  $region19: #{cam_and_logits.6} parent=0 // pred_check_branch
    %20 = sbr.rel (0) target = $region21
  $region20: #{cam_and_logits.6} parent=0 // pred_region
    _
  $region21: #{cam_and_logits.6} parent=0 // pred_fallthru
    _
  // Predicated region
  $region22: #{cam_and_logits.6} parent=0 // pred_check
    _
  $region23: #{cam_and_logits.6} parent=0 // pred_check_branch
    %22 = sbr.rel (0) target = $region25
  $region24: #{cam_and_logits.6} parent=0 // pred_region
    _
  $region25: #{cam_and_logits.6} parent=0 // pred_fallthru
    _
  %v24 = vld [vmem:[%s0] sm:$0xf]
  %v25 = vld [vmem:[%s1] sm:$0xf]
  %v26 = vld [vmem:[%s1 + $0x4] sm:$0xf]
  %v27 = vld [vmem:[%s1 + $0x8] sm:$0xf]
  %v28 = vld [vmem:[%s1 + $0xc] sm:$0xf]
  %v29 = vld [vmem:[%s1 + $0x10] sm:$0xf]
  %v30 = vld [vmem:[%s1 + $0x14] sm:$0xf]
  %v31 = vld [vmem:[%s1 + $0x18] sm:$0xf]
  %v32 = vld [vmem:[%s1 + $0x1c] sm:$0xf]
  %v33 = vld [vmem:[%s2] sm:$0x1]
  %v35 = vlaneseq
  %v36 = vshrl.u32 %v35, 7
  %v37 = vsub.s32 0, %v36
  %v38 = vrot.slane %v33, %v37
  %v48 = vunpack.c.l.b16 %v25
  %v49 = vunpack.c.l.b16 %v26
  %v50 = vunpack.c.l.b16 %v27
  %v51 = vunpack.c.l.b16 %v28
  %v52 = vunpack.c.l.b16 %v29
  %v53 = vunpack.c.l.b16 %v30
  %v54 = vunpack.c.l.b16 %v31
  %v55 = vunpack.c.l.b16 %v32
  %v56 = vpack.c.b16 %v49, %v48
  %v57 = vpack.c.b16 %v51, %v50
  %v58 = vpack.c.b16 %v53, %v52
  %v59 = vpack.c.b16 %v55, %v54
  %vm64 = vcmask 523264
  %v66 = vsel %vm64, %v24, 0
  %68 = vmatprep.subr.bf16.mxu0 0
  %69 = vmatpush1.bf16.msra.mxu0 0
  %70 = vmatprep.subr.bf16.mxu0 0
  %71 = vmatpush1.bf16.msra.mxu0 0
  %72 = vmatprep.subr.bf16.mxu0 0
  %73 = vmatpush1.bf16.msra.mxu0 0
  %74 = vmatprep.subr.bf16.mxu0 0
  %75 = vmatpush1.bf16.msra.mxu0 0
  %76 = vmatprep.subr.bf16.mxu0 0
  %77 = vmatpush1.bf16.msra.mxu0 %v59
  %78 = vmatprep.subr.bf16.mxu0 0
  %79 = vmatpush1.bf16.msra.mxu0 %v58
  %80 = vmatprep.subr.bf16.mxu0 0
  %81 = vmatpush1.bf16.msra.mxu0 %v57
  %82 = vmatprep.subr.bf16.mxu0 0
  %83 = vmatpush1.bf16.msra.mxu0 %v56
  %84 = vmatprep.subr.bf16.mxu0 0
  %85 = vmatpush2.bf16.msra.mxu0 0
  %86 = vmatprep.subr.bf16.mxu0 0
  %87 = vmatpush2.bf16.msra.mxu0 0
  %88 = vmatprep.subr.bf16.mxu0 0
  %89 = vmatpush2.bf16.msra.mxu0 0
  %90 = vmatprep.subr.bf16.mxu0 0
  %91 = vmatpush2.bf16.msra.mxu0 0
  %92 = vmatprep.subr.bf16.mxu0 0
  %93 = vmatpush2.bf16.msra.mxu0 0
  %94 = vmatprep.subr.bf16.mxu0 0
  %95 = vmatpush2.bf16.msra.mxu0 0
  %96 = vmatprep.subr.bf16.mxu0 0
  %97 = vmatpush2.bf16.msra.mxu0 0
  %98 = vmatprep.subr.bf16.mxu0 0
  %99 = vmatpush2.bf16.msra.mxu0 0
  %100 = vmatprep.mubr.bf16.mxu0 0
  %101 = vmatmul.mubr.bf16.gmra.mxu0 %v66
  %v102 = vpop.f32.mrf.mxu0
  %v103 = vadd.f32 %v38, %v102
  %v104 = vpop.f32.mrf.mxu0
  %v105 = vpop.f32.mrf.mxu0
  %v106 = vpop.f32.mrf.mxu0
  %107 = vdwg.mxu0
  %v108 = vmax.f32 %v103, 0.0
  %v109 = vpack.c.bf16 %v108, %v108
  %v110 = vld [vmem:[%s3] sm:$0xff]
  %v111 = vld [vmem:[%s3 + $0x8] sm:$0xff]
  %v112 = vld [vmem:[%s3 + $0x10] sm:$0xff]
  %v113 = vld [vmem:[%s3 + $0x18] sm:$0xff]
  %v114 = vld [vmem:[%s3 + $0x20] sm:$0xff]
  %v115 = vld [vmem:[%s3 + $0x28] sm:$0xff]
  %v116 = vld [vmem:[%s3 + $0x30] sm:$0xff]
  %v117 = vld [vmem:[%s3 + $0x38] sm:$0xff]
  %v118 = vld [vmem:[%s3 + $0x40] sm:$0xff]
  %v119 = vld [vmem:[%s3 + $0x48] sm:$0xff]
  %v120 = vld [vmem:[%s3 + $0x50] sm:$0xff]
  %v121 = vld [vmem:[%s3 + $0x58] sm:$0xff]
  %v122 = vld [vmem:[%s3 + $0x60] sm:$0xff]
  %v123 = vld [vmem:[%s3 + $0x68] sm:$0xff]
  %v124 = vld [vmem:[%s3 + $0x70] sm:$0xff]
  %v125 = vld [vmem:[%s3 + $0x78] sm:$0xff]
  %v126 = vld [vmem:[%s4] sm:$0x3]
  %v128 = vlaneseq
  %v129 = vshrl.u32 %v128, 7
  %v130 = vsub.s32 0, %v129
  %v131 = vrot.slane %v126, %v130
  %v132 = vlaneseq
  %v133 = vshrl.u32 %v132, 7
  %v134 = vsub.s32 1, %v133
  %v135 = vrot.slane %v126, %v134
  %v154 = vunpack.c.l.b16 %v110
  %v155 = vunpack.c.h.b16 %v110
  %v156 = vunpack.c.l.b16 %v111
  %v157 = vunpack.c.h.b16 %v111
  %v158 = vunpack.c.l.b16 %v112
  %v159 = vunpack.c.h.b16 %v112
  %v160 = vunpack.c.l.b16 %v113
  %v161 = vunpack.c.h.b16 %v113
  %v162 = vunpack.c.l.b16 %v114
  %v163 = vunpack.c.h.b16 %v114
  %v164 = vunpack.c.l.b16 %v115
  %v165 = vunpack.c.h.b16 %v115
  %v166 = vunpack.c.l.b16 %v116
  %v167 = vunpack.c.h.b16 %v116
  %v168 = vunpack.c.l.b16 %v117
  %v169 = vunpack.c.h.b16 %v117
  %v170 = vunpack.c.l.b16 %v118
  %v171 = vunpack.c.h.b16 %v118
  %v172 = vunpack.c.l.b16 %v119
  %v173 = vunpack.c.h.b16 %v119
  %v174 = vunpack.c.l.b16 %v120
  %v175 = vunpack.c.h.b16 %v120
  %v176 = vunpack.c.l.b16 %v121
  %v177 = vunpack.c.h.b16 %v121
  %v178 = vunpack.c.l.b16 %v122
  %v179 = vunpack.c.h.b16 %v122
  %v180 = vunpack.c.l.b16 %v123
  %v181 = vunpack.c.h.b16 %v123
  %v182 = vunpack.c.l.b16 %v124
  %v183 = vunpack.c.h.b16 %v124
  %v184 = vunpack.c.l.b16 %v125
  %v185 = vunpack.c.h.b16 %v125
  %v186 = vpack.c.b16 %v156, %v154
  %v187 = vpack.c.b16 %v157, %v155
  %v188 = vpack.c.b16 %v160, %v158
  %v189 = vpack.c.b16 %v161, %v159
  %v190 = vpack.c.b16 %v164, %v162
  %v191 = vpack.c.b16 %v165, %v163
  %v192 = vpack.c.b16 %v168, %v166
  %v193 = vpack.c.b16 %v169, %v167
  %v194 = vpack.c.b16 %v172, %v170
  %v195 = vpack.c.b16 %v173, %v171
  %v196 = vpack.c.b16 %v176, %v174
  %v197 = vpack.c.b16 %v177, %v175
  %v198 = vpack.c.b16 %v180, %v178
  %v199 = vpack.c.b16 %v181, %v179
  %v200 = vpack.c.b16 %v184, %v182
  %v201 = vpack.c.b16 %v185, %v183
  %218 = vmatprep.subr.bf16.mxu0 %v201
  %219 = vmatpush1.bf16.msra.mxu0 %v200
  %220 = vmatprep.subr.bf16.mxu0 %v199
  %221 = vmatpush1.bf16.msra.mxu0 %v198
  %222 = vmatprep.subr.bf16.mxu0 %v197
  %223 = vmatpush1.bf16.msra.mxu0 %v196
  %224 = vmatprep.subr.bf16.mxu0 %v195
  %225 = vmatpush1.bf16.msra.mxu0 %v194
  %226 = vmatprep.subr.bf16.mxu0 %v193
  %227 = vmatpush1.bf16.msra.mxu0 %v192
  %228 = vmatprep.subr.bf16.mxu0 %v191
  %229 = vmatpush1.bf16.msra.mxu0 %v190
  %230 = vmatprep.subr.bf16.mxu0 %v189
  %231 = vmatpush1.bf16.msra.mxu0 %v188
  %232 = vmatprep.subr.bf16.mxu0 %v187
  %233 = vmatpush1.bf16.msra.mxu0 %v186
  %234 = vmatprep.subr.bf16.mxu0 0
  %235 = vmatpush2.bf16.msra.mxu0 0
  %236 = vmatprep.subr.bf16.mxu0 0
  %237 = vmatpush2.bf16.msra.mxu0 0
  %238 = vmatprep.subr.bf16.mxu0 0
  %239 = vmatpush2.bf16.msra.mxu0 0
  %240 = vmatprep.subr.bf16.mxu0 0
  %241 = vmatpush2.bf16.msra.mxu0 0
  %242 = vmatprep.subr.bf16.mxu0 0
  %243 = vmatpush2.bf16.msra.mxu0 0
  %244 = vmatprep.subr.bf16.mxu0 0
  %245 = vmatpush2.bf16.msra.mxu0 0
  %246 = vmatprep.subr.bf16.mxu0 0
  %247 = vmatpush2.bf16.msra.mxu0 0
  %248 = vmatprep.subr.bf16.mxu0 0
  %249 = vmatpush2.bf16.msra.mxu0 0
  %250 = vmatprep.mubr.bf16.mxu0 0
  %251 = vmatmul.mubr.bf16.gmra.mxu0 %v109
  %v252 = vpop.f32.mrf.mxu0
  %v253 = vadd.f32 %v131, %v252
  %v254 = vpop.f32.mrf.mxu0
  %v255 = vadd.f32 %v135, %v254
  %v256 = vpop.f32.mrf.mxu0
  %v257 = vpop.f32.mrf.mxu0
  %258 = vdwg.mxu0
  %v259 = vmax.f32 %v253, 0.0
  %v260 = vmax.f32 %v255, 0.0
  %v261 = vpack.c.bf16 %v259, %v259
  %v262 = vpack.c.bf16 %v260, %v260
  %v263 = vld [vmem:[%s5] sm:$0xf]
  %v264 = vld [vmem:[%s5 + $0x4] sm:$0xf]
  %v265 = vld [vmem:[%s5 + $0x8] sm:$0xf]
  %v266 = vld [vmem:[%s5 + $0xc] sm:$0xf]
  %v267 = vld [vmem:[%s5 + $0x10] sm:$0xf]
  %v268 = vld [vmem:[%s5 + $0x14] sm:$0xf]
  %v269 = vld [vmem:[%s5 + $0x18] sm:$0xf]
  %v270 = vld [vmem:[%s5 + $0x1c] sm:$0xf]
  %v271 = vld [vmem:[%s5 + $0x20] sm:$0xf]
  %v272 = vld [vmem:[%s5 + $0x24] sm:$0xf]
  %v273 = vld [vmem:[%s5 + $0x28] sm:$0xf]
  %v274 = vld [vmem:[%s5 + $0x2c] sm:$0xf]
  %v275 = vld [vmem:[%s5 + $0x30] sm:$0xf]
  %v276 = vld [vmem:[%s5 + $0x34] sm:$0xf]
  %v277 = vld [vmem:[%s5 + $0x38] sm:$0xf]
  %v278 = vld [vmem:[%s5 + $0x3c] sm:$0xf]
  %v279 = vld [vmem:[%s5 + $0x40] sm:$0xf]
  %v280 = vld [vmem:[%s5 + $0x44] sm:$0xf]
  %v281 = vld [vmem:[%s5 + $0x48] sm:$0xf]
  %v282 = vld [vmem:[%s5 + $0x4c] sm:$0xf]
  %v283 = vld [vmem:[%s5 + $0x50] sm:$0xf]
  %v284 = vld [vmem:[%s5 + $0x54] sm:$0xf]
  %v285 = vld [vmem:[%s5 + $0x58] sm:$0xf]
  %v286 = vld [vmem:[%s5 + $0x5c] sm:$0xf]
  %v287 = vld [vmem:[%s5 + $0x60] sm:$0xf]
  %v288 = vld [vmem:[%s5 + $0x64] sm:$0xf]
  %v289 = vld [vmem:[%s5 + $0x68] sm:$0xf]
  %v290 = vld [vmem:[%s5 + $0x6c] sm:$0xf]
  %v291 = vld [vmem:[%s5 + $0x70] sm:$0xf]
  %v292 = vld [vmem:[%s5 + $0x74] sm:$0xf]
  %v293 = vld [vmem:[%s5 + $0x78] sm:$0xf]
  %v294 = vld [vmem:[%s5 + $0x7c] sm:$0xf]
  %v327 = vunpack.c.l.b16 %v263
  %v328 = vunpack.c.l.b16 %v264
  %v329 = vunpack.c.l.b16 %v265
  %v330 = vunpack.c.l.b16 %v266
  %v331 = vunpack.c.l.b16 %v267
  %v332 = vunpack.c.l.b16 %v268
  %v333 = vunpack.c.l.b16 %v269
  %v334 = vunpack.c.l.b16 %v270
  %v335 = vunpack.c.l.b16 %v271
  %v336 = vunpack.c.l.b16 %v272
  %v337 = vunpack.c.l.b16 %v273
  %v338 = vunpack.c.l.b16 %v274
  %v339 = vunpack.c.l.b16 %v275
  %v340 = vunpack.c.l.b16 %v276
  %v341 = vunpack.c.l.b16 %v277
  %v342 = vunpack.c.l.b16 %v278
  %v343 = vunpack.c.l.b16 %v279
  %v344 = vunpack.c.l.b16 %v280
  %v345 = vunpack.c.l.b16 %v281
  %v346 = vunpack.c.l.b16 %v282
  %v347 = vunpack.c.l.b16 %v283
  %v348 = vunpack.c.l.b16 %v284
  %v349 = vunpack.c.l.b16 %v285
  %v350 = vunpack.c.l.b16 %v286
  %v351 = vunpack.c.l.b16 %v287
  %v352 = vunpack.c.l.b16 %v288
  %v353 = vunpack.c.l.b16 %v289
  %v354 = vunpack.c.l.b16 %v290
  %v355 = vunpack.c.l.b16 %v291
  %v356 = vunpack.c.l.b16 %v292
  %v357 = vunpack.c.l.b16 %v293
  %v358 = vunpack.c.l.b16 %v294
  %v359 = vpack.c.b16 %v328, %v327
  %v360 = vpack.c.b16 %v330, %v329
  %v361 = vpack.c.b16 %v332, %v331
  %v362 = vpack.c.b16 %v334, %v333
  %v363 = vpack.c.b16 %v336, %v335
  %v364 = vpack.c.b16 %v338, %v337
  %v365 = vpack.c.b16 %v340, %v339
  %v366 = vpack.c.b16 %v342, %v341
  %v367 = vpack.c.b16 %v344, %v343
  %v368 = vpack.c.b16 %v346, %v345
  %v369 = vpack.c.b16 %v348, %v347
  %v370 = vpack.c.b16 %v350, %v349
  %v371 = vpack.c.b16 %v352, %v351
  %v372 = vpack.c.b16 %v354, %v353
  %v373 = vpack.c.b16 %v356, %v355
  %v374 = vpack.c.b16 %v358, %v357
  %391 = vmatprep.subr.bf16.mxu0 0
  %392 = vmatpush1.bf16.msra.mxu0 %v366
  %393 = vmatprep.subr.bf16.mxu0 0
  %394 = vmatpush1.bf16.msra.mxu0 %v365
  %395 = vmatprep.subr.bf16.mxu0 0
  %396 = vmatpush1.bf16.msra.mxu0 %v364
  %397 = vmatprep.subr.bf16.mxu0 0
  %398 = vmatpush1.bf16.msra.mxu0 %v363
  %399 = vmatprep.subr.bf16.mxu0 0
  %400 = vmatpush1.bf16.msra.mxu0 %v362
  %401 = vmatprep.subr.bf16.mxu0 0
  %402 = vmatpush1.bf16.msra.mxu0 %v361
  %403 = vmatprep.subr.bf16.mxu0 0
  %404 = vmatpush1.bf16.msra.mxu0 %v360
  %405 = vmatprep.subr.bf16.mxu0 0
  %406 = vmatpush1.bf16.msra.mxu0 %v359
  %407 = vmatprep.subr.bf16.mxu0 0
  %408 = vmatpush2.bf16.msra.mxu0 %v374
  %409 = vmatprep.subr.bf16.mxu0 0
  %410 = vmatpush2.bf16.msra.mxu0 %v373
  %411 = vmatprep.subr.bf16.mxu0 0
  %412 = vmatpush2.bf16.msra.mxu0 %v372
  %413 = vmatprep.subr.bf16.mxu0 0
  %414 = vmatpush2.bf16.msra.mxu0 %v371
  %415 = vmatprep.subr.bf16.mxu0 0
  %416 = vmatpush2.bf16.msra.mxu0 %v370
  %417 = vmatprep.subr.bf16.mxu0 0
  %418 = vmatpush2.bf16.msra.mxu0 %v369
  %419 = vmatprep.subr.bf16.mxu0 0
  %420 = vmatpush2.bf16.msra.mxu0 %v368
  %421 = vmatprep.subr.bf16.mxu0 0
  %422 = vmatpush2.bf16.msra.mxu0 %v367
  %423 = vmatprep.mubr.bf16.mxu0 %v262
  %424 = vmatmul.mubr.bf16.gmra.mxu0 %v261
  %v425 = vpop.f32.mrf.mxu0
  %v426 = vadd.f32 0.0, %v425
  %v427 = vpop.f32.mrf.mxu0
  %v428 = vpop.f32.mrf.mxu0
  %v429 = vpop.f32.mrf.mxu0
  %430 = vdwg.mxu0
  %431 = vst [vmem:[%s6] sm:$0xff] %v426
  // Predicated region
  $region26: #{cam_and_logits.6} parent=0 // pred_check
    _
  $region27: #{cam_and_logits.6} parent=0 // pred_check_branch
    %433 = sbr.rel (0) target = $region29
  $region28: #{cam_and_logits.6} parent=0 // pred_region
    _
  $region29: #{cam_and_logits.6} parent=0 // pred_fallthru
    _
  // Predicated region
  $region30: #{cam_and_logits.6} parent=0 // pred_check
    _
  $region31: #{cam_and_logits.6} parent=0 // pred_check_branch
    %435 = sbr.rel (0) target = $region33
  $region32: #{cam_and_logits.6} parent=0 // pred_region
    _
  $region33: #{cam_and_logits.6} parent=0 // pred_fallthru
    _

// kernel: cam_and_logits.7
$region0: #{cam_and_logits.7}
  #allocation0 [shape = 'u32[]', space=smem, size = 0x4, offset = 0x4, fixed_abs, tag = 'smem constant byte address 0x4 - core index']
  #allocation1 [shape = 'u32[144,128]{1,0:T(1,128)}', space=vmem, size = 0x12000, scoped, tag = 'internal scratch']
  %s0 = inlined_call_operand.vmem [shape: f32[2,4,128], index: 0, kind: input, shape index: {}]
  %s1 = inlined_call_operand.hbm [shape: f32[2,128], index: 1, kind: output, shape index: {}]
  %s2 = sld [smem:[#allocation0]]
  $region14: #{cam_and_logits.7} parent=0
    _
  %s4 = ssub.s32 1, %s2
  %s5 = scalar_select 0, %s4, %s2
  $region1: #{cam_and_logits.7} parent=0
    #allocation2 [shape = 'u8[1024]{0}', space=vmem, size = 0x400, scoped, tag = 'output window, operand 0, single buffered']
    #allocation3 [shape = 's32[1]{0}', space=sflag, size = 0x4, scoped, tag = 'scoped memory for cam_and_logits.7']
    %6 = vsyncpa [#allocation3], 0
    // Predicated region
    $region2: #{cam_and_logits.7} parent=1 // pred_check
      _
    $region3: #{cam_and_logits.7} parent=1 // pred_check_branch
      %8 = sbr.rel (0) target = $region5
    $region4: #{cam_and_logits.7} parent=1 // pred_region
      _
    $region5: #{cam_and_logits.7} parent=1 // pred_fallthru
      _
    %v9 = vld [vmem:[%s0] sm:$0xf]
    %v10 = vld [vmem:[%s0 + $0x4] sm:$0xf]
    %vm11 = vcmask 1043456
    %v12 = vsel %vm11, %v9, 0.0
    %v13 = vrot.slane %v12, 4
    %v14 = vadd.f32 %v12, %v13
    %v15 = vrot.slane %v14, 2
    %v16 = vadd.f32 %v14, %v15
    %v17 = vrot.slane %v16, 1
    %v18 = vadd.f32 %v16, %v17
    %v19 = vsel %vm11, %v10, 0.0
    %v20 = vrot.slane %v19, 4
    %v21 = vadd.f32 %v19, %v20
    %v22 = vrot.slane %v21, 2
    %v23 = vadd.f32 %v21, %v22
    %v24 = vrot.slane %v23, 1
    %v25 = vadd.f32 %v23, %v24
    %v26 = vrcp.pop 4.0
    %v27 = vmul.f32 %v18, %v26
    %v28 = vmul.f32 %v25, %v26
    %vm31 = vcmask 1041409
    %v32 = vsel %vm31, %v28, %v27
    %34 = vst [vmem:[#allocation2] sm:$0x3] %v32
    // Predicated region
    $region6: #{cam_and_logits.7} parent=1 // pred_check
      _
    $region7: #{cam_and_logits.7} parent=1 // pred_check_branch
      %36 = sbr.rel (0) target = $region9
    $region8: #{cam_and_logits.7} parent=1 // pred_region
      %s38 = ssub.s32 32, 32
      %39 = vsyncadd [#allocation3], %s38
      %s41 = sshll.u32 [#allocation2], 4
      %s42 = int_to_ptr.vmem [resolvable:$true] %s41
      %44 = dma.vmem_to_hbm [thread:$0]  %s42, 32, %s1, [#allocation3]
    $region9: #{cam_and_logits.7} parent=1 // pred_fallthru
      _
    // Predicated region
    $region10: #{cam_and_logits.7} parent=1 // pred_check
      _
    $region11: #{cam_and_logits.7} parent=1 // pred_check_branch
      %46 = sbr.rel (0) target = $region13
    $region12: #{cam_and_logits.7} parent=1 // pred_region
      %47 = dma.done [#allocation3], 32
    $region13: #{cam_and_logits.7} parent=1 // pred_fallthru
      _
    %48 = vsyncpa [#allocation3], 1

</llo_original>
